<compile_context>
chip_gen: v7x
topology: tpu7x:2x2x1
jax: 0.10.0
libtpu: 0.0.40
codegen_flags: <defaults>
</compile_context>

<pallas_src>
import math
import functools

import jax
import jax.numpy as jnp
from jax import lax
from jax.experimental import pallas as pl
from jax.experimental.pallas import tpu as pltpu


# ----------------------- Fused QKV projection kernel ----------------------- #
def _qkv_proj_kernel(x_ref, w_ref, b_ref, q_ref, k_ref, v_ref, *, dim):
    # acc = x_tile @ [Wq | Wk | Wv] + [bq | bk | bv]  (single wide MXU matmul)
    acc = jnp.dot(x_ref[...], w_ref[...], preferred_element_type=jnp.float32)
    acc = acc + b_ref[...]
    q_ref[...] = acc[:, 0 * dim:1 * dim].astype(q_ref.dtype)
    k_ref[...] = acc[:, 1 * dim:2 * dim].astype(k_ref.dtype)
    v_ref[...] = acc[:, 2 * dim:3 * dim].astype(v_ref.dtype)


def qkv_projection(x, w_qkv, b_qkv, *, tile_m=256):
    # x: (N, dim), w_qkv: (dim, 3*dim), b_qkv: (3*dim,)
    n, dim = x.shape
    tm = n if n <= tile_m else tile_m
    itemsize = jnp.dtype(x.dtype).itemsize
    cost = pl.CostEstimate(
        flops=2 * n * dim * 3 * dim,
        transcendentals=0,
        bytes_accessed=(n * dim + dim * 3 * dim + 3 * dim + 3 * n * dim) * itemsize,
    )
    out_sds = jax.ShapeDtypeStruct((n, dim), x.dtype)
    kernel = functools.partial(_qkv_proj_kernel, dim=dim)
    return pl.pallas_call(
        kernel,
        out_shape=(out_sds, out_sds, out_sds),
        grid_spec=pltpu.PrefetchScalarGridSpec(
            num_scalar_prefetch=0,
            grid=(pl.cdiv(n, tm),),
            in_specs=[
                pl.BlockSpec((tm, dim), lambda i: (i, 0)),        # x rows tile
                pl.BlockSpec((dim, 3 * dim), lambda i: (0, 0)),   # fused weight (resident)
                pl.BlockSpec((1, 3 * dim), lambda i: (0, 0)),     # fused bias
            ],
            out_specs=[
                pl.BlockSpec((tm, dim), lambda i: (i, 0)),
                pl.BlockSpec((tm, dim), lambda i: (i, 0)),
                pl.BlockSpec((tm, dim), lambda i: (i, 0)),
            ],
        ),
        compiler_params=pltpu.CompilerParams(
            dimension_semantics=("parallel",)),
        cost_estimate=cost,
    )(x, w_qkv, b_qkv.reshape(1, 3 * dim))


# ------------- Attention (all heads per batch) + fused out_lin ------------- #
def _attn_kernel(mask_ref, q_ref, k_ref, v_ref, ow_ref, ob_ref, o_ref,
                 *, n_heads, scale):
    dim = q_ref.shape[2]
    dph = dim // n_heads

    q = q_ref[0].astype(jnp.float32) * scale        # (qlen, dim), scaled once
    k = k_ref[0]                                    # (klen, dim)
    v = v_ref[0]                                    # (klen, dim)

    # Additive mask bias: 0 where attendable, -1e30 where masked.
    # Large-finite (not -inf) avoids NaN on fully-masked rows.
    bias = jnp.where(mask_ref[0] == 0.0,
                     jnp.float32(-1e30), jnp.float32(0.0))  # (1, klen)

    ctx_heads = []
    for h in range(n_heads):                        # unrolled; n_heads is static
        lo = h * dph
        qh = q[:, lo:lo + dph]
        kh = k[:, lo:lo + dph]
        vh = v[:, lo:lo + dph]
        # scores: contract last axes directly (no explicit k.T / XLU transpose)
        s = lax.dot_general(qh, kh, (((1,), (1,)), ((), ())),
                            preferred_element_type=jnp.float32)  # (qlen, klen)
        s = s + bias
        m = jnp.max(s, axis=-1, keepdims=True)
        p = jnp.exp(s - m)                           # unnormalized probabilities
        l = jnp.sum(p, axis=-1, keepdims=True)
        ctx_h = jnp.dot(p.astype(vh.dtype), vh,
                        preferred_element_type=jnp.float32)      # (qlen, dph)
        # Deferred softmax normalization: scale the small (qlen, dph) context,
        # approx reciprocal runs on the otherwise-idle EUP slot.
        ctx_heads.append(ctx_h * pl.reciprocal(l, approx=True))

    ctx = jnp.concatenate(ctx_heads, axis=-1)        # (qlen, dim), lane-dense
    # Fused output projection epilogue (out_lin): ctx @ Wo + bo.
    out = jnp.dot(ctx.astype(ow_ref.dtype), ow_ref[...],
                  preferred_element_type=jnp.float32) + ob_ref[...]
    o_ref[0] = out.astype(o_ref.dtype)


def mha_attention(q, k, v, mask3, o_w, o_b, n_heads):
    # q: (bs, qlen, dim); k, v: (bs, klen, dim); mask3: (bs, 1, klen) float32
    bs, qlen, dim = q.shape
    klen = k.shape[1]
    dph = dim // n_heads
    itemsize = jnp.dtype(q.dtype).itemsize
    cost = pl.CostEstimate(
        flops=bs * (4 * n_heads * qlen * klen * dph + 2 * qlen * dim * dim),
        transcendentals=bs * n_heads * qlen * klen,
        bytes_accessed=(bs * (qlen + 2 * klen + qlen) * dim
                        + dim * dim + dim + bs * klen) * itemsize,
    )
    kernel = functools.partial(_attn_kernel, n_heads=n_heads,
                               scale=1.0 / math.sqrt(dph))
    return pl.pallas_call(
        kernel,
        out_shape=jax.ShapeDtypeStruct((bs, qlen, dim), q.dtype),
        grid_spec=pltpu.PrefetchScalarGridSpec(
            num_scalar_prefetch=0,
            grid=(bs,),
            in_specs=[
                pl.BlockSpec((1, 1, klen), lambda b: (b, 0, 0)),    # mask row
                pl.BlockSpec((1, qlen, dim), lambda b: (b, 0, 0)),  # q
                pl.BlockSpec((1, klen, dim), lambda b: (b, 0, 0)),  # k
                pl.BlockSpec((1, klen, dim), lambda b: (b, 0, 0)),  # v
                pl.BlockSpec((dim, dim), lambda b: (0, 0)),         # Wo (resident)
                pl.BlockSpec((1, dim), lambda b: (0, 0)),           # bo
            ],
            out_specs=pl.BlockSpec((1, qlen, dim), lambda b: (b, 0, 0)),
        ),
        compiler_params=pltpu.CompilerParams(
            dimension_semantics=("parallel",)),
        cost_estimate=cost,
    )(mask3, q, k, v, o_w, o_b.reshape(1, dim))


# ------------------------------ Module wrapper ----------------------------- #
class MultiHeadAttentionPallas:
    def __init__(self, n_heads, dim, dropout, key):
        assert dim % n_heads == 0
        self.n_heads = n_heads
        self.dim = dim
        self.dropout = dropout  # identity in eval mode
        bound = 1.0 / math.sqrt(dim)
        keys = jax.random.split(key, 8)

        def init_lin(kw, kb):
            # Stored as (in, out); equivalent to nn.Linear's x @ W^T + b.
            w = jax.random.uniform(kw, (dim, dim), jnp.float32, -bound, bound)
            b = jax.random.uniform(kb, (dim,), jnp.float32, -bound, bound)
            return w, b

        self.q_w, self.q_b = init_lin(keys[0], keys[1])
        self.k_w, self.k_b = init_lin(keys[2], keys[3])
        self.v_w, self.v_b = init_lin(keys[4], keys[5])
        self.o_w, self.o_b = init_lin(keys[6], keys[7])
        # Fused QKV weight/bias for the single projection kernel.
        self.qkv_w = jnp.concatenate([self.q_w, self.k_w, self.v_w], axis=1)
        self.qkv_b = jnp.concatenate([self.q_b, self.k_b, self.v_b], axis=0)

    def __call__(self, inp, mask):
        # TODO(synk): kv/cache (cross-attention / incremental decoding) paths
        #             of the original module are not implemented.
        bs, qlen, dim = inp.shape
        x2 = inp.reshape(bs * qlen, dim)
        q2, k2, v2 = qkv_projection(x2, self.qkv_w, self.qkv_b)
        q = q2.reshape(bs, qlen, dim)            # free reshapes (contiguous)
        k = k2.reshape(bs, qlen, dim)
        v = v2.reshape(bs, qlen, dim)
        mask3 = mask.astype(jnp.float32).reshape(bs, 1, qlen)
        # out_lin is fused into the attention kernel epilogue.
        return mha_attention(q, k, v, mask3, self.o_w, self.o_b, self.n_heads)


# ------------------------------- Reference --------------------------------- #
def reference_mha(mod, inp, mask):
    bs, qlen, dim = inp.shape
    nh, dph = mod.n_heads, dim // mod.n_heads
    q = inp @ mod.q_w + mod.q_b
    k = inp @ mod.k_w + mod.k_b
    v = inp @ mod.v_w + mod.v_b
    sh = lambda t: t.reshape(bs, qlen, nh, dph).transpose(0, 2, 1, 3)
    q, k, v = sh(q), sh(k), sh(v)
    q = q / math.sqrt(dph)
    s = jnp.einsum("bhqd,bhkd->bhqk", q, k)
    m = (mask == 0).reshape(bs, 1, 1, qlen)
    s = jnp.where(m, -jnp.inf, s)
    w = jax.nn.softmax(s, axis=-1)
    ctx = jnp.einsum("bhqk,bhkd->bhqd", w, v)
    ctx = ctx.transpose(0, 2, 1, 3).reshape(bs, qlen, dim)
    return ctx @ mod.o_w + mod.o_b


if __name__ == "__main__":
    bs, qlen, dim, n_heads = 2, 8, 32, 4

    key = jax.random.PRNGKey(0)
    k_param, k_inp = jax.random.split(key)
    mod = MultiHeadAttentionPallas(n_heads, dim, dropout=0.0, key=k_param)

    inp = jax.random.normal(k_inp, (bs, qlen, dim), jnp.float32)
    mask = jnp.ones((bs, qlen), jnp.float32).at[1, 6:].set(0.0)  # 0 = masked

    out = mod(inp, mask)
    out = jax.block_until_ready(out)

    ref = reference_mha(mod, inp, mask)
    assert out.shape == (bs, qlen, dim)
    # Tolerance accounts for the approximate (EUP) reciprocal in the softmax
    # normalization; everything else accumulates in f32.
    assert jnp.allclose(out, ref, atol=2e-3, rtol=2e-3), "mismatch vs reference"

    print("KERNEL_OK")
</pallas_src>

<mosaic_0001>
module attributes {stable_mosaic.version = 11 : i64} {
  func.func @_qkv_proj_kernel(%arg0: i32, %arg1: memref<16x32xf32, #tpu.memory_space<vmem>>, %arg2: memref<32x96xf32, #tpu.memory_space<vmem>>, %arg3: memref<1x96xf32, #tpu.memory_space<vmem>>, %arg4: memref<16x32xf32, #tpu.memory_space<vmem>>, %arg5: memref<16x32xf32, #tpu.memory_space<vmem>>, %arg6: memref<16x32xf32, #tpu.memory_space<vmem>>) attributes {dimension_semantics = [#tpu.dimension_semantics<parallel>], iteration_bounds = array<i64: 1>, scalar_prefetch = 0 : i64, scratch_operands = 0 : i64, tpu.core_type = #tpu.core_type<tc>, window_params = [{transform_indices = @transform_0, window_bounds = array<i64: 16, 32>}, {pipeline_mode = #tpu.pipeline_mode<synchronous>, transform_indices = @transform_1, window_bounds = array<i64: 32, 96>}, {pipeline_mode = #tpu.pipeline_mode<synchronous>, transform_indices = @transform_2, window_bounds = array<i64: 1, 96>}, {transform_indices = @transform_3, window_bounds = array<i64: 16, 32>}, {transform_indices = @transform_4, window_bounds = array<i64: 16, 32>}, {transform_indices = @transform_5, window_bounds = array<i64: 16, 32>}]} {
    %c0 = arith.constant 0 : index
    %c0_0 = arith.constant 0 : index
    %0 = vector.load %arg1[%c0, %c0_0] : memref<16x32xf32, #tpu.memory_space<vmem>>, vector<16x32xf32>
    %c0_1 = arith.constant 0 : index
    %c0_2 = arith.constant 0 : index
    %1 = vector.load %arg2[%c0_1, %c0_2] : memref<32x96xf32, #tpu.memory_space<vmem>>, vector<32x96xf32>
    %cst = arith.constant dense<0.000000e+00> : vector<16x96xf32>
    %2 = tpu.matmul %0, %1, %cst {dimension_numbers = #tpu.dot_dimension_numbers<[1], [0], [0], [1], [0, 0, 1, 1], [], []>} : vector<16x32xf32>, vector<32x96xf32>, vector<16x96xf32> -> vector<16x96xf32>
    %c0_3 = arith.constant 0 : index
    %c0_4 = arith.constant 0 : index
    %3 = vector.load %arg3[%c0_3, %c0_4] : memref<1x96xf32, #tpu.memory_space<vmem>>, vector<1x96xf32>
    %4 = vector.broadcast %3 : vector<1x96xf32> to vector<16x96xf32>
    %5 = arith.addf %2, %4 : vector<16x96xf32>
    %6 = vector.extract_strided_slice %5 {offsets = [0, 0], sizes = [16, 32], strides = [1, 1]} : vector<16x96xf32> to vector<16x32xf32>
    %c0_5 = arith.constant 0 : index
    %c0_6 = arith.constant 0 : index
    %7 = vector.load %arg4[%c0_5, %c0_6] : memref<16x32xf32, #tpu.memory_space<vmem>>, vector<16x32xf32>
    tpu.vector_store %arg4[%c0_5, %c0_6], %6 {strides = array<i32>} : memref<16x32xf32, #tpu.memory_space<vmem>>, vector<16x32xf32>,
    %8 = vector.extract_strided_slice %5 {offsets = [0, 32], sizes = [16, 32], strides = [1, 1]} : vector<16x96xf32> to vector<16x32xf32>
    %c0_7 = arith.constant 0 : index
    %c0_8 = arith.constant 0 : index
    %9 = vector.load %arg5[%c0_7, %c0_8] : memref<16x32xf32, #tpu.memory_space<vmem>>, vector<16x32xf32>
    tpu.vector_store %arg5[%c0_7, %c0_8], %8 {strides = array<i32>} : memref<16x32xf32, #tpu.memory_space<vmem>>, vector<16x32xf32>,
    %10 = vector.extract_strided_slice %5 {offsets = [0, 64], sizes = [16, 32], strides = [1, 1]} : vector<16x96xf32> to vector<16x32xf32>
    %c0_9 = arith.constant 0 : index
    %c0_10 = arith.constant 0 : index
    %11 = vector.load %arg6[%c0_9, %c0_10] : memref<16x32xf32, #tpu.memory_space<vmem>>, vector<16x32xf32>
    tpu.vector_store %arg6[%c0_9, %c0_10], %10 {strides = array<i32>} : memref<16x32xf32, #tpu.memory_space<vmem>>, vector<16x32xf32>,
    return
  }
  func.func @transform_0(%arg0: i32) -> (i32, i32) {
    %c0_i32 = arith.constant 0 : i32
    %c0_i32_0 = arith.constant 0 : i32
    return %arg0, %c0_i32 : i32, i32
  }
  func.func @transform_1(%arg0: i32) -> (i32, i32) {
    %c0_i32 = arith.constant 0 : i32
    %c0_i32_0 = arith.constant 0 : i32
    %c0_i32_1 = arith.constant 0 : i32
    return %c0_i32, %c0_i32_0 : i32, i32
  }
  func.func @transform_2(%arg0: i32) -> (i32, i32) {
    %c0_i32 = arith.constant 0 : i32
    %c0_i32_0 = arith.constant 0 : i32
    %c0_i32_1 = arith.constant 0 : i32
    return %c0_i32, %c0_i32_0 : i32, i32
  }
  func.func @transform_3(%arg0: i32) -> (i32, i32) {
    %c0_i32 = arith.constant 0 : i32
    %c0_i32_0 = arith.constant 0 : i32
    return %arg0, %c0_i32 : i32, i32
  }
  func.func @transform_4(%arg0: i32) -> (i32, i32) {
    %c0_i32 = arith.constant 0 : i32
    %c0_i32_0 = arith.constant 0 : i32
    return %arg0, %c0_i32 : i32, i32
  }
  func.func @transform_5(%arg0: i32) -> (i32, i32) {
    %c0_i32 = arith.constant 0 : i32
    %c0_i32_0 = arith.constant 0 : i32
    return %arg0, %c0_i32 : i32, i32
  }
}

</mosaic_0001>

<llo_original>
// kernel: tpu_custom_call.1
$region0: #{tpu_custom_call.1}
  #allocation0 [shape = 'u32[]', space=smem, size = 0x4, offset = 0x4, fixed_abs, tag = 'smem constant byte address 0x4 - core index']
  #allocation1 [shape = 'u32[144,128]{1,0:T(1,128)}', space=vmem, size = 0x12000, scoped, tag = 'internal scratch']
  %s0 = inlined_call_operand.hbm [shape: f32[16,32], index: 0, kind: input, shape index: {}]
  %s1 = inlined_call_operand.hbm [shape: f32[32,96], index: 1, kind: input, shape index: {}]
  %s2 = inlined_call_operand.vmem [shape: f32[1,96], index: 2, kind: input, shape index: {}]
  %s3 = inlined_call_operand.hbm [shape: f32[16,32], index: 3, kind: output, shape index: {0}]
  %s4 = inlined_call_operand.hbm [shape: f32[16,32], index: 4, kind: output, shape index: {1}]
  %s5 = inlined_call_operand.hbm [shape: f32[16,32], index: 5, kind: output, shape index: {2}]
  %6 = xla_tuple %s3, %s4, %s5
  %s7 = sld [smem:[#allocation0]]
  $region46: #{tpu_custom_call.1} parent=0
    _
  %s9 = ssub.s32 1, %s7
  %s10 = scalar_select 0, %s9, %s7
  $region1: #{tpu_custom_call.1} parent=0
    #allocation2 [shape = 'u8[8192]{0}', space=vmem, size = 0x2000, scoped, tag = 'input window, operand 0, single buffered']
    #allocation3 [shape = 's32[1]{0}', space=sflag, size = 0x4, scoped, tag = 'scoped memory for tpu_custom_call.1']
    #allocation4 [shape = 's32[1]{0}', space=sflag, size = 0x4, scoped, tag = 'scoped memory for tpu_custom_call.1']
    #allocation5 [shape = 'u8[16384]{0}', space=vmem, size = 0x4000, scoped, tag = 'input window, operand 1, single buffered']
    #allocation6 [shape = 's32[1]{0}', space=sflag, size = 0x4, scoped, tag = 'scoped memory for tpu_custom_call.1']
    #allocation7 [shape = 'u8[8192]{0}', space=vmem, size = 0x2000, scoped, tag = 'output window, operand 0, single buffered']
    #allocation8 [shape = 'u8[8192]{0}', space=vmem, size = 0x2000, scoped, tag = 'output window, operand 1, single buffered']
    #allocation9 [shape = 's32[1]{0}', space=sflag, size = 0x4, scoped, tag = 'scoped memory for tpu_custom_call.1']
    #allocation10 [shape = 'u8[8192]{0}', space=vmem, size = 0x2000, scoped, tag = 'output window, operand 2, single buffered']
    %11 = vsyncpa [#allocation3], 0
    %12 = vsyncpa [#allocation6], 0
    %13 = vsyncpa [#allocation4], 0
    %14 = vsyncpa [#allocation9], 0
    // Predicated region
    $region2: #{tpu_custom_call.1} parent=1 // pred_check
      _
    $region3: #{tpu_custom_call.1} parent=1 // pred_check_branch
      %16 = sbr.rel (0) target = $region5
    $region4: #{tpu_custom_call.1} parent=1 // pred_region
      %s18 = ssub.s32 256, 256
      %19 = vsyncadd [#allocation3], %s18
      %s20 = sshll.u32 [#allocation2], 4
      %s21 = int_to_ptr.vmem [resolvable:$true] %s20
      %26 = dma.hbm_to_vmem [thread:$0]  %s0, 256, %s21, [#allocation3], 128, 128, 8
    $region5: #{tpu_custom_call.1} parent=1 // pred_fallthru
      _
    // Predicated region
    $region6: #{tpu_custom_call.1} parent=1 // pred_check
      _
    $region7: #{tpu_custom_call.1} parent=1 // pred_check_branch
      %28 = sbr.rel (0) target = $region9
    $region8: #{tpu_custom_call.1} parent=1 // pred_region
      %s30 = ssub.s32 512, 512
      %31 = vsyncadd [#allocation6], %s30
      %s32 = sshll.u32 [#allocation5], 4
      %s33 = int_to_ptr.vmem [resolvable:$true] %s32
      %38 = dma.hbm_to_vmem [thread:$0]  %s1, 512, %s33, [#allocation6], 128, 128, 8
    $region9: #{tpu_custom_call.1} parent=1 // pred_fallthru
      _
    // Predicated region
    $region10: #{tpu_custom_call.1} parent=1 // pred_check
      _
    $region11: #{tpu_custom_call.1} parent=1 // pred_check_branch
      %40 = sbr.rel (0) target = $region13
    $region12: #{tpu_custom_call.1} parent=1 // pred_region
      _
    $region13: #{tpu_custom_call.1} parent=1 // pred_fallthru
      _
    // Predicated region
    $region14: #{tpu_custom_call.1} parent=1 // pred_check
      _
    $region15: #{tpu_custom_call.1} parent=1 // pred_check_branch
      %42 = sbr.rel (0) target = $region17
    $region16: #{tpu_custom_call.1} parent=1 // pred_region
      %43 = dma.done [#allocation3], 256
    $region17: #{tpu_custom_call.1} parent=1 // pred_fallthru
      _
    // Predicated region
    $region18: #{tpu_custom_call.1} parent=1 // pred_check
      _
    $region19: #{tpu_custom_call.1} parent=1 // pred_check_branch
      %45 = sbr.rel (0) target = $region21
    $region20: #{tpu_custom_call.1} parent=1 // pred_region
      %46 = dma.done [#allocation6], 512
    $region21: #{tpu_custom_call.1} parent=1 // pred_fallthru
      _
    %v47 = vld [vmem:[#allocation2] sm:$0xff]
    %v48 = vld [vmem:[#allocation2 + $0x8] sm:$0xff]
    %v49 = vld [vmem:[#allocation5] sm:$0xff]
    %v50 = vld [vmem:[#allocation5 + $0x8] sm:$0xff]
    %v51 = vld [vmem:[#allocation5 + $0x10] sm:$0xff]
    %v52 = vld [vmem:[#allocation5 + $0x18] sm:$0xff]
    %v53 = vld [vmem:[%s2] sm:$0x1]
    %v55 = vlaneseq
    %v56 = vshrl.u32 %v55, 7
    %v57 = vsub.s32 0, %v56
    %v58 = vrot.slane %v53, %v57
    %vm60 = vcmask 261120
    %v62 = vsel %vm60, %v47, 0
    %v65 = vsel %vm60, %v48, 0
    %67 = vmatprep.subr.mxu0 0.0
    %68 = vmatpush1.msra.mxu0 %v49
    %69 = vmatprep.subr.mxu0 0.0
    %70 = vmatpush1.msra.mxu0 %v50
    %71 = vmatprep.subr.mxu0 0.0
    %72 = vmatpush1.msra.mxu0 %v51
    %73 = vmatprep.subr.mxu0 0.0
    %74 = vmatpush1.msra.mxu0 %v52
    %75 = vmatprep.subr.mxu0 0.0
    %76 = vmatpush1.msra.mxu0 0.0
    %77 = vmatprep.subr.mxu0 0.0
    %78 = vmatpush1.msra.mxu0 0.0
    %79 = vmatprep.subr.mxu0 0.0
    %80 = vmatpush1.msra.mxu0 0.0
    %81 = vmatprep.subr.mxu0 0.0
    %82 = vmatpush1.msra.mxu0 0.0
    %83 = vmatprep.subr.mxu0 0.0
    %84 = vmatpush1.msra.mxu0 0.0
    %85 = vmatprep.subr.mxu0 0.0
    %86 = vmatpush1.msra.mxu0 0.0
    %87 = vmatprep.subr.mxu0 0.0
    %88 = vmatpush1.msra.mxu0 0.0
    %89 = vmatprep.subr.mxu0 0.0
    %90 = vmatpush1.msra.mxu0 0.0
    %91 = vmatprep.subr.mxu0 0.0
    %92 = vmatpush1.msra.mxu0 0.0
    %93 = vmatprep.subr.mxu0 0.0
    %94 = vmatpush1.msra.mxu0 0.0
    %95 = vmatprep.subr.mxu0 0.0
    %96 = vmatpush1.msra.mxu0 0.0
    %97 = vmatprep.subr.mxu0 0.0
    %98 = vmatpush1.msra.mxu0 0.0
    %99 = vmatprep.subr.mxu0 0.0
    %100 = vmatpush1.msra.mxu0 0.0
    %101 = vmatprep.subr.mxu0 0.0
    %102 = vmatpush1.msra.mxu0 0.0
    %103 = vmatprep.subr.mxu0 0.0
    %104 = vmatpush1.msra.mxu0 0.0
    %105 = vmatprep.subr.mxu0 0.0
    %106 = vmatpush1.msra.mxu0 0.0
    %107 = vmatprep.subr.mxu0 0.0
    %108 = vmatpush1.msra.mxu0 0.0
    %109 = vmatprep.subr.mxu0 0.0
    %110 = vmatpush1.msra.mxu0 0.0
    %111 = vmatprep.subr.mxu0 0.0
    %112 = vmatpush1.msra.mxu0 0.0
    %113 = vmatprep.subr.mxu0 0.0
    %114 = vmatpush1.msra.mxu0 0.0
    %115 = vmatprep.subr.mxu0 0.0
    %116 = vmatpush1.msra.mxu0 0.0
    %117 = vmatprep.subr.mxu0 0.0
    %118 = vmatpush1.msra.mxu0 0.0
    %119 = vmatprep.subr.mxu0 0.0
    %120 = vmatpush1.msra.mxu0 0.0
    %121 = vmatprep.subr.mxu0 0.0
    %122 = vmatpush1.msra.mxu0 0.0
    %123 = vmatprep.subr.mxu0 0.0
    %124 = vmatpush1.msra.mxu0 0.0
    %125 = vmatprep.subr.mxu0 0.0
    %126 = vmatpush1.msra.mxu0 0.0
    %127 = vmatprep.subr.mxu0 0.0
    %128 = vmatpush1.msra.mxu0 0.0
    %129 = vmatprep.subr.mxu0 0.0
    %130 = vmatpush1.msra.mxu0 0.0
    %131 = vmatprep.mubr.f32.mxu0 0.0
    %132 = vmatmul.mubr.f32.gmra.mrb[0].mxu0 %v62
    %v133 = vpop.f32.mrb[0].mxu0
    %v134 = vadd.f32 %v58, %v133
    %v135 = vpop.f32.mrb[0].mxu0
    %136 = vmatprep.mubr.f32.mxu0 0.0
    %137 = vmatmul.mubr.f32.gmra.mrb[0].mxu0 %v65
    %v138 = vpop.f32.mrb[0].mxu0
    %v139 = vadd.f32 %v58, %v138
    %v140 = vpop.f32.mrb[0].mxu0
    %141 = vdwg.mxu0
    %142 = vst.msk [vmem:[#allocation7] sm:$0xff] %vm60, %v134
    %143 = vst.msk [vmem:[#allocation7 + $0x8] sm:$0xff] %vm60, %v139
    %146 = vrot.lane.b32.xlu0 %v134, 96
    %v147 = vpop.permute.xlu0 %146
    %148 = vrot.lane.b32.xlu0 %v139, 96
    %v149 = vpop.permute.xlu0 %148
    %152 = vst.msk [vmem:[#allocation8] sm:$0xff] %vm60, %v147
    %153 = vst.msk [vmem:[#allocation8 + $0x8] sm:$0xff] %vm60, %v149
    %154 = vrot.lane.b32.xlu0 %v134, 64
    %v155 = vpop.permute.xlu0 %154
    %156 = vrot.lane.b32.xlu0 %v139, 64
    %v157 = vpop.permute.xlu0 %156
    %160 = vst.msk [vmem:[#allocation10] sm:$0xff] %vm60, %v155
    %161 = vst.msk [vmem:[#allocation10 + $0x8] sm:$0xff] %vm60, %v157
    // Predicated region
    $region22: #{tpu_custom_call.1} parent=1 // pred_check
      _
    $region23: #{tpu_custom_call.1} parent=1 // pred_check_branch
      %163 = sbr.rel (0) target = $region25
    $region24: #{tpu_custom_call.1} parent=1 // pred_region
      %s165 = ssub.s32 256, 256
      %166 = vsyncadd [#allocation4], %s165
      %s167 = sshll.u32 [#allocation7], 4
      %s168 = int_to_ptr.vmem [resolvable:$true] %s167
      %173 = dma.vmem_to_hbm [thread:$0]  %s168, 256, %s3, [#allocation4], 128, 128, 8
    $region25: #{tpu_custom_call.1} parent=1 // pred_fallthru
      _
    // Predicated region
    $region26: #{tpu_custom_call.1} parent=1 // pred_check
      _
    $region27: #{tpu_custom_call.1} parent=1 // pred_check_branch
      %175 = sbr.rel (0) target = $region29
    $region28: #{tpu_custom_call.1} parent=1 // pred_region
      %s177 = ssub.s32 256, 256
      %178 = vsyncadd [#allocation9], %s177
      %s179 = sshll.u32 [#allocation8], 4
      %s180 = int_to_ptr.vmem [resolvable:$true] %s179
      %185 = dma.vmem_to_hbm [thread:$0]  %s180, 256, %s4, [#allocation9], 128, 128, 8
    $region29: #{tpu_custom_call.1} parent=1 // pred_fallthru
      _
    // Predicated region
    $region30: #{tpu_custom_call.1} parent=1 // pred_check
      _
    $region31: #{tpu_custom_call.1} parent=1 // pred_check_branch
      %187 = sbr.rel (0) target = $region33
    $region32: #{tpu_custom_call.1} parent=1 // pred_region
      %s189 = ssub.s32 256, 256
      %190 = vsyncadd [#allocation9], %s189
      %s191 = sshll.u32 [#allocation10], 4
      %s192 = int_to_ptr.vmem [resolvable:$true] %s191
      %197 = dma.vmem_to_hbm [thread:$0]  %s192, 256, %s5, [#allocation9], 128, 128, 8
    $region33: #{tpu_custom_call.1} parent=1 // pred_fallthru
      _
    // Predicated region
    $region34: #{tpu_custom_call.1} parent=1 // pred_check
      _
    $region35: #{tpu_custom_call.1} parent=1 // pred_check_branch
      %199 = sbr.rel (0) target = $region37
    $region36: #{tpu_custom_call.1} parent=1 // pred_region
      %200 = dma.done [#allocation4], 256
    $region37: #{tpu_custom_call.1} parent=1 // pred_fallthru
      _
    // Predicated region
    $region38: #{tpu_custom_call.1} parent=1 // pred_check
      _
    $region39: #{tpu_custom_call.1} parent=1 // pred_check_branch
      %202 = sbr.rel (0) target = $region41
    $region40: #{tpu_custom_call.1} parent=1 // pred_region
      %203 = dma.done [#allocation9], 256
    $region41: #{tpu_custom_call.1} parent=1 // pred_fallthru
      _
    // Predicated region
    $region42: #{tpu_custom_call.1} parent=1 // pred_check
      _
    $region43: #{tpu_custom_call.1} parent=1 // pred_check_branch
      %205 = sbr.rel (0) target = $region45
    $region44: #{tpu_custom_call.1} parent=1 // pred_region
      %206 = dma.done [#allocation9], 256
    $region45: #{tpu_custom_call.1} parent=1 // pred_fallthru
      _
    %207 = vsyncpa [#allocation3], 1
    %208 = vsyncpa [#allocation6], 1
    %209 = vsyncpa [#allocation4], 1
    %210 = vsyncpa [#allocation9], 1

</llo_original>
